<compile_context>
chip_gen: v7x
topology: tpu7x:2x2x1
jax: 0.10.0
libtpu: 0.0.40
codegen_flags: <defaults>
</compile_context>

<pallas_src>
import jax
import jax.numpy as jnp
from jax.experimental import pallas as pl
from jax.experimental.pallas import tpu as pltpu

D = 2              # input / output feature dim (from the PyTorch module)
M = 100            # hidden dim (from the PyTorch module)
MP = 128           # hidden dim padded to the 128-lane width
OW = 8             # narrowed output width (>= D; sliced back to D in wrapper)
MAX_BLOCK_B = 8192 # batch-tile cap (VMEM budget: ~1-2 KiB/row intermediates)


def _mlp_kernel(x_ref, t_ref, temb_ref, w1_ref, b1_ref, w2_ref, b2_ref,
                w3_ref, b3_ref, o_ref):
    x0 = x_ref[:, 0:1]                   # (TB, 1)
    x1 = x_ref[:, 1:2]                   # (TB, 1)
    t = t_ref[...]                       # (TB, 1)

    # Layer 1 on the VPU: K=2 contraction -> two broadcast FMAs, fused with
    # bias, ReLU and the t-conditioning add (all f32 element-wise).
    h = x0 * w1_ref[0:1, :] + x1 * w1_ref[1:2, :] + b1_ref[...]   # (TB, MP)
    h = jnp.maximum(h, 0.0) + t * temb_ref[...]

    # Layer 2 on the MXU: bf16 operands, f32 accumulation.
    h = jnp.dot(h.astype(jnp.bfloat16), w2_ref[...],
                preferred_element_type=jnp.float32) + b2_ref[...]
    h = jnp.maximum(h, 0.0)

    # Layer 3 on the MXU: (TB, MP) x (MP, OW) -> narrow (TB, OW) store.
    o_ref[...] = (jnp.dot(h.astype(jnp.bfloat16), w3_ref[...],
                          preferred_element_type=jnp.float32)
                  + b3_ref[...]).astype(o_ref.dtype)


def _round_up(n, m):
    return ((n + m - 1) // m) * m


def pad_params(params):
    """Pad logical params to lane-aligned kernel operands (zeros in padding).

    Weights are stored (in_features, out_features); w2/w3 are cast to bf16
    once here so the MXU gets native-width operands and resident VMEM halves.
    Zeroed padding rows/cols + zero padded biases guarantee padding never
    leaks into the first M / D columns.
    """
    t_emb, w1, b1, w2, b2, w3, b3 = params
    temb_p = jnp.zeros((1, MP), jnp.float32).at[0, :M].set(t_emb)
    w1_p = jnp.zeros((D, MP), jnp.float32).at[:, :M].set(w1)
    b1_p = jnp.zeros((1, MP), jnp.float32).at[0, :M].set(b1)
    w2_p = jnp.zeros((MP, MP), jnp.float32).at[:M, :M].set(w2).astype(jnp.bfloat16)
    b2_p = jnp.zeros((1, MP), jnp.float32).at[0, :M].set(b2)
    w3_p = jnp.zeros((MP, OW), jnp.float32).at[:M, :D].set(w3).astype(jnp.bfloat16)
    b3_p = jnp.zeros((1, OW), jnp.float32).at[0, :D].set(b3)
    return (temb_p, w1_p, b1_p, w2_p, b2_p, w3_p, b3_p)


def t_conditioned_mlp(x, t, padded_params, *, block_b=None):
    """x: (B, D) f32, t: (B,) f32 -> (B, D) f32."""
    B = x.shape[0]
    if block_b is None:
        # Big tiles to amortize per-step overhead, but aim for >= 2 grid
        # steps at large B so "parallel" uses both TensorCores on v7x.
        block_b = min(MAX_BLOCK_B, _round_up(pl.cdiv(B, 2), 8))
    block_b = max(8, _round_up(block_b, 8))
    b_pad = _round_up(B, block_b)

    x = x.astype(jnp.float32)
    t = t.astype(jnp.float32)
    if b_pad != B:
        x = jnp.pad(x, ((0, b_pad - B), (0, 0)))
        t = jnp.pad(t, ((0, b_pad - B),))
    t2d = t.reshape(b_pad, 1)

    temb_p, w1_p, b1_p, w2_p, b2_p, w3_p, b3_p = padded_params

    def resident(a):  # whole-array block, same block index every grid step
        return pl.BlockSpec(a.shape, lambda i: (0,) * a.ndim)

    out_pad = pl.pallas_call(
        _mlp_kernel,
        out_shape=jax.ShapeDtypeStruct((b_pad, OW), jnp.float32),
        grid=(b_pad // block_b,),
        in_specs=[
            pl.BlockSpec((block_b, D), lambda i: (i, 0)),   # x tile
            pl.BlockSpec((block_b, 1), lambda i: (i, 0)),   # t tile
            resident(temb_p), resident(w1_p), resident(b1_p),
            resident(w2_p), resident(b2_p),
            resident(w3_p), resident(b3_p),
        ],
        out_specs=pl.BlockSpec((block_b, OW), lambda i: (i, 0)),
        compiler_params=pltpu.CompilerParams(
            dimension_semantics=("parallel",),
            vmem_limit_bytes=48 * 1024 * 1024,
        ),
    )(x, t2d, temb_p, w1_p, b1_p, w2_p, b2_p, w3_p, b3_p)

    return out_pad[:B, :D]


def init_params(key):
    """Logical (unpadded) params, weights stored (in_features, out_features)."""
    ks = jax.random.split(key, 7)
    t_emb = jax.random.normal(ks[0], (M,), jnp.float32)      # torch.randn((M,))

    def linear(kw, kb, fan_in, fan_out):
        # PyTorch nn.Linear default: U(-1/sqrt(fan_in), 1/sqrt(fan_in)).
        bound = 1.0 / jnp.sqrt(jnp.float32(fan_in))
        w = jax.random.uniform(kw, (fan_in, fan_out), jnp.float32, -bound, bound)
        b = jax.random.uniform(kb, (fan_out,), jnp.float32, -bound, bound)
        return w, b

    w1, b1 = linear(ks[1], ks[2], D, M)
    w2, b2 = linear(ks[3], ks[4], M, M)
    w3, b3 = linear(ks[5], ks[6], M, D)
    return (t_emb, w1, b1, w2, b2, w3, b3)


def reference(x, t, params):
    t_emb, w1, b1, w2, b2, w3, b3 = params
    te = t[:, None] * t_emb[None, :]
    h = jnp.maximum(x @ w1 + b1[None, :], 0.0) + te
    h = jnp.maximum(h @ w2 + b2[None, :], 0.0)
    return h @ w3 + b3[None, :]


if __name__ == "__main__":
    key = jax.random.PRNGKey(0)
    k_param, k_x, k_t = jax.random.split(key, 3)

    params = init_params(k_param)
    padded = pad_params(params)

    # Small demo shape (single grid step).
    B = 8
    x = jax.random.normal(k_x, (B, D), jnp.float32)
    t = jax.random.uniform(k_t, (B,), jnp.float32)

    out = t_conditioned_mlp(x, t, padded)
    out = jax.block_until_ready(out)
    ref = reference(x, t, params)
    assert out.shape == (B, D)
    # bf16 MXU operands -> loosened tolerance vs. the f32 reference.
    assert jnp.allclose(out, ref, atol=5e-2, rtol=5e-2)

    # Multi-tile grid + batch padding (B not a tile multiple) + default tile.
    B2 = 300
    k_x2, k_t2 = jax.random.split(k_x)
    x2 = jax.random.normal(k_x2, (B2, D), jnp.float32)
    t2 = jax.random.uniform(k_t2, (B2,), jnp.float32)
    out2 = jax.block_until_ready(t_conditioned_mlp(x2, t2, padded, block_b=128))
    ref2 = reference(x2, t2, params)
    assert out2.shape == (B2, D)
    assert jnp.allclose(out2, ref2, atol=5e-2, rtol=5e-2)

    out3 = jax.block_until_ready(t_conditioned_mlp(x2, t2, padded))  # default block_b
    assert jnp.allclose(out3, ref2, atol=5e-2, rtol=5e-2)

    print("KERNEL_OK")
</pallas_src>

<mosaic_0001>
module attributes {stable_mosaic.version = 11 : i64} {
  func.func @_mlp_kernel(%arg0: i32, %arg1: memref<8x2xf32, #tpu.memory_space<vmem>>, %arg2: memref<8x1xf32, #tpu.memory_space<vmem>>, %arg3: memref<1x128xf32, #tpu.memory_space<vmem>>, %arg4: memref<2x128xf32, #tpu.memory_space<vmem>>, %arg5: memref<1x128xf32, #tpu.memory_space<vmem>>, %arg6: memref<128x128xbf16, #tpu.memory_space<vmem>>, %arg7: memref<1x128xf32, #tpu.memory_space<vmem>>, %arg8: memref<128x8xbf16, #tpu.memory_space<vmem>>, %arg9: memref<1x8xf32, #tpu.memory_space<vmem>>, %arg10: memref<8x8xf32, #tpu.memory_space<vmem>>) attributes {dimension_semantics = [#tpu.dimension_semantics<parallel>], iteration_bounds = array<i64: 1>, scalar_prefetch = 0 : i64, scratch_operands = 0 : i64, tpu.core_type = #tpu.core_type<tc>, window_params = [{transform_indices = @transform_0, window_bounds = array<i64: 8, 2>}, {transform_indices = @transform_1, window_bounds = array<i64: 8, 1>}, {pipeline_mode = #tpu.pipeline_mode<synchronous>, transform_indices = @transform_2, window_bounds = array<i64: 1, 128>}, {pipeline_mode = #tpu.pipeline_mode<synchronous>, transform_indices = @transform_3, window_bounds = array<i64: 2, 128>}, {pipeline_mode = #tpu.pipeline_mode<synchronous>, transform_indices = @transform_4, window_bounds = array<i64: 1, 128>}, {pipeline_mode = #tpu.pipeline_mode<synchronous>, transform_indices = @transform_5, window_bounds = array<i64: 128, 128>}, {pipeline_mode = #tpu.pipeline_mode<synchronous>, transform_indices = @transform_6, window_bounds = array<i64: 1, 128>}, {pipeline_mode = #tpu.pipeline_mode<synchronous>, transform_indices = @transform_7, window_bounds = array<i64: 128, 8>}, {pipeline_mode = #tpu.pipeline_mode<synchronous>, transform_indices = @transform_8, window_bounds = array<i64: 1, 8>}, {transform_indices = @transform_9, window_bounds = array<i64: 8, 8>}]} {
    %c0 = arith.constant 0 : index
    %c0_0 = arith.constant 0 : index
    %0 = vector.load %arg1[%c0, %c0_0] : memref<8x2xf32, #tpu.memory_space<vmem>>, vector<8x1xf32>
    %c0_1 = arith.constant 0 : index
    %c1 = arith.constant 1 : index
    %1 = vector.load %arg1[%c0_1, %c1] : memref<8x2xf32, #tpu.memory_space<vmem>>, vector<8x1xf32>
    %c0_2 = arith.constant 0 : index
    %c0_3 = arith.constant 0 : index
    %2 = vector.load %arg2[%c0_2, %c0_3] : memref<8x1xf32, #tpu.memory_space<vmem>>, vector<8x1xf32>
    %c0_4 = arith.constant 0 : index
    %c0_5 = arith.constant 0 : index
    %3 = vector.load %arg4[%c0_4, %c0_5] : memref<2x128xf32, #tpu.memory_space<vmem>>, vector<1x128xf32>
    %4 = vector.broadcast %0 : vector<8x1xf32> to vector<8x128xf32>
    %5 = vector.broadcast %3 : vector<1x128xf32> to vector<8x128xf32>
    %6 = arith.mulf %4, %5 : vector<8x128xf32>
    %c1_6 = arith.constant 1 : index
    %c0_7 = arith.constant 0 : index
    %7 = vector.load %arg4[%c1_6, %c0_7] : memref<2x128xf32, #tpu.memory_space<vmem>>, vector<1x128xf32>
    %8 = vector.broadcast %1 : vector<8x1xf32> to vector<8x128xf32>
    %9 = vector.broadcast %7 : vector<1x128xf32> to vector<8x128xf32>
    %10 = arith.mulf %8, %9 : vector<8x128xf32>
    %11 = arith.addf %6, %10 : vector<8x128xf32>
    %c0_8 = arith.constant 0 : index
    %c0_9 = arith.constant 0 : index
    %12 = vector.load %arg5[%c0_8, %c0_9] : memref<1x128xf32, #tpu.memory_space<vmem>>, vector<1x128xf32>
    %13 = vector.broadcast %12 : vector<1x128xf32> to vector<8x128xf32>
    %14 = arith.addf %11, %13 : vector<8x128xf32>
    %cst = arith.constant 0.000000e+00 : f32
    %15 = vector.broadcast %cst : f32 to vector<8x128xf32>
    %16 = arith.maximumf %14, %15 : vector<8x128xf32>
    %c0_10 = arith.constant 0 : index
    %c0_11 = arith.constant 0 : index
    %17 = vector.load %arg3[%c0_10, %c0_11] : memref<1x128xf32, #tpu.memory_space<vmem>>, vector<1x128xf32>
    %18 = vector.broadcast %2 : vector<8x1xf32> to vector<8x128xf32>
    %19 = vector.broadcast %17 : vector<1x128xf32> to vector<8x128xf32>
    %20 = arith.mulf %18, %19 : vector<8x128xf32>
    %21 = arith.addf %16, %20 : vector<8x128xf32>
    %22 = arith.truncf %21 : vector<8x128xf32> to vector<8x128xbf16>
    %c0_12 = arith.constant 0 : index
    %c0_13 = arith.constant 0 : index
    %23 = vector.load %arg6[%c0_12, %c0_13] : memref<128x128xbf16, #tpu.memory_space<vmem>>, vector<128x128xbf16>
    %cst_14 = arith.constant dense<0.000000e+00> : vector<8x128xf32>
    %24 = tpu.matmul %22, %23, %cst_14 {dimension_numbers = #tpu.dot_dimension_numbers<[1], [0], [0], [1], [0, 0, 1, 1], [], []>} : vector<8x128xbf16>, vector<128x128xbf16>, vector<8x128xf32> -> vector<8x128xf32>
    %c0_15 = arith.constant 0 : index
    %c0_16 = arith.constant 0 : index
    %25 = vector.load %arg7[%c0_15, %c0_16] : memref<1x128xf32, #tpu.memory_space<vmem>>, vector<1x128xf32>
    %26 = vector.broadcast %25 : vector<1x128xf32> to vector<8x128xf32>
    %27 = arith.addf %24, %26 : vector<8x128xf32>
    %cst_17 = arith.constant 0.000000e+00 : f32
    %28 = vector.broadcast %cst_17 : f32 to vector<8x128xf32>
    %29 = arith.maximumf %27, %28 : vector<8x128xf32>
    %30 = arith.truncf %29 : vector<8x128xf32> to vector<8x128xbf16>
    %c0_18 = arith.constant 0 : index
    %c0_19 = arith.constant 0 : index
    %31 = vector.load %arg8[%c0_18, %c0_19] : memref<128x8xbf16, #tpu.memory_space<vmem>>, vector<128x8xbf16>
    %cst_20 = arith.constant dense<0.000000e+00> : vector<8x8xf32>
    %32 = tpu.matmul %30, %31, %cst_20 {dimension_numbers = #tpu.dot_dimension_numbers<[1], [0], [0], [1], [0, 0, 1, 1], [], []>} : vector<8x128xbf16>, vector<128x8xbf16>, vector<8x8xf32> -> vector<8x8xf32>
    %c0_21 = arith.constant 0 : index
    %c0_22 = arith.constant 0 : index
    %33 = vector.load %arg9[%c0_21, %c0_22] : memref<1x8xf32, #tpu.memory_space<vmem>>, vector<1x8xf32>
    %34 = vector.broadcast %33 : vector<1x8xf32> to vector<8x8xf32>
    %35 = arith.addf %32, %34 : vector<8x8xf32>
    %c0_23 = arith.constant 0 : index
    %c0_24 = arith.constant 0 : index
    %36 = vector.load %arg10[%c0_23, %c0_24] : memref<8x8xf32, #tpu.memory_space<vmem>>, vector<8x8xf32>
    tpu.vector_store %arg10[%c0_23, %c0_24], %35 {strides = array<i32>} : memref<8x8xf32, #tpu.memory_space<vmem>>, vector<8x8xf32>,
    return
  }
  func.func @transform_0(%arg0: i32) -> (i32, i32) {
    %c0_i32 = arith.constant 0 : i32
    %c0_i32_0 = arith.constant 0 : i32
    return %arg0, %c0_i32 : i32, i32
  }
  func.func @transform_1(%arg0: i32) -> (i32, i32) {
    %c0_i32 = arith.constant 0 : i32
    %c0_i32_0 = arith.constant 0 : i32
    return %arg0, %c0_i32 : i32, i32
  }
  func.func @transform_2(%arg0: i32) -> (i32, i32) {
    %c0_i32 = arith.constant 0 : i32
    %c0_i32_0 = arith.constant 0 : i32
    %c0_i32_1 = arith.constant 0 : i32
    return %c0_i32, %c0_i32_0 : i32, i32
  }
  func.func @transform_3(%arg0: i32) -> (i32, i32) {
    %c0_i32 = arith.constant 0 : i32
    %c0_i32_0 = arith.constant 0 : i32
    %c0_i32_1 = arith.constant 0 : i32
    return %c0_i32, %c0_i32_0 : i32, i32
  }
  func.func @transform_4(%arg0: i32) -> (i32, i32) {
    %c0_i32 = arith.constant 0 : i32
    %c0_i32_0 = arith.constant 0 : i32
    %c0_i32_1 = arith.constant 0 : i32
    return %c0_i32, %c0_i32_0 : i32, i32
  }
  func.func @transform_5(%arg0: i32) -> (i32, i32) {
    %c0_i32 = arith.constant 0 : i32
    %c0_i32_0 = arith.constant 0 : i32
    %c0_i32_1 = arith.constant 0 : i32
    return %c0_i32, %c0_i32_0 : i32, i32
  }
  func.func @transform_6(%arg0: i32) -> (i32, i32) {
    %c0_i32 = arith.constant 0 : i32
    %c0_i32_0 = arith.constant 0 : i32
    %c0_i32_1 = arith.constant 0 : i32
    return %c0_i32, %c0_i32_0 : i32, i32
  }
  func.func @transform_7(%arg0: i32) -> (i32, i32) {
    %c0_i32 = arith.constant 0 : i32
    %c0_i32_0 = arith.constant 0 : i32
    %c0_i32_1 = arith.constant 0 : i32
    return %c0_i32, %c0_i32_0 : i32, i32
  }
  func.func @transform_8(%arg0: i32) -> (i32, i32) {
    %c0_i32 = arith.constant 0 : i32
    %c0_i32_0 = arith.constant 0 : i32
    %c0_i32_1 = arith.constant 0 : i32
    return %c0_i32, %c0_i32_0 : i32, i32
  }
  func.func @transform_9(%arg0: i32) -> (i32, i32) {
    %c0_i32 = arith.constant 0 : i32
    %c0_i32_0 = arith.constant 0 : i32
    return %arg0, %c0_i32 : i32, i32
  }
}

</mosaic_0001>

<llo_original>
// kernel: tpu_custom_call.1
$region0: #{tpu_custom_call.1}
  #allocation0 [shape = 'u32[]', space=smem, size = 0x4, offset = 0x4, fixed_abs, tag = 'smem constant byte address 0x4 - core index']
  #allocation1 [shape = 'u32[144,128]{1,0:T(1,128)}', space=vmem, size = 0x12000, scoped, tag = 'internal scratch']
  %s0 = inlined_call_operand.vmem [shape: f32[8,2], index: 0, kind: input, shape index: {}]
  %s1 = inlined_call_operand.vmem [shape: f32[8,1], index: 1, kind: input, shape index: {}]
  %s2 = inlined_call_operand.vmem [shape: f32[1,128], index: 2, kind: input, shape index: {}]
  %s3 = inlined_call_operand.vmem [shape: f32[2,128], index: 3, kind: input, shape index: {}]
  %s4 = inlined_call_operand.vmem [shape: f32[1,128], index: 4, kind: input, shape index: {}]
  %s5 = inlined_call_operand.vmem [shape: bf16[128,128], index: 5, kind: input, shape index: {}]
  %s6 = inlined_call_operand.vmem [shape: f32[1,128], index: 6, kind: input, shape index: {}]
  %s7 = inlined_call_operand.vmem [shape: bf16[128,8], index: 7, kind: input, shape index: {}]
  %s8 = inlined_call_operand.vmem [shape: f32[1,8], index: 8, kind: input, shape index: {}]
  %s9 = inlined_call_operand.hbm [shape: f32[8,8], index: 9, kind: output, shape index: {}]
  %s10 = sld [smem:[#allocation0]]
  $region46: #{tpu_custom_call.1} parent=0
    _
  %s12 = ssub.s32 1, %s10
  %s13 = scalar_select 0, %s12, %s10
  $region1: #{tpu_custom_call.1} parent=0
    #allocation2 [shape = 'u8[4096]{0}', space=vmem, size = 0x1000, scoped, tag = 'output window, operand 0, single buffered']
    #allocation3 [shape = 's32[1]{0}', space=sflag, size = 0x4, scoped, tag = 'scoped memory for tpu_custom_call.1']
    %14 = vsyncpa [#allocation3], 0
    // Predicated region
    $region2: #{tpu_custom_call.1} parent=1 // pred_check
      _
    $region3: #{tpu_custom_call.1} parent=1 // pred_check_branch
      %16 = sbr.rel (0) target = $region5
    $region4: #{tpu_custom_call.1} parent=1 // pred_region
      _
    $region5: #{tpu_custom_call.1} parent=1 // pred_fallthru
      _
    // Predicated region
    $region6: #{tpu_custom_call.1} parent=1 // pred_check
      _
    $region7: #{tpu_custom_call.1} parent=1 // pred_check_branch
      %18 = sbr.rel (0) target = $region9
    $region8: #{tpu_custom_call.1} parent=1 // pred_region
      _
    $region9: #{tpu_custom_call.1} parent=1 // pred_fallthru
      _
    // Predicated region
    $region10: #{tpu_custom_call.1} parent=1 // pred_check
      _
    $region11: #{tpu_custom_call.1} parent=1 // pred_check_branch
      %20 = sbr.rel (0) target = $region13
    $region12: #{tpu_custom_call.1} parent=1 // pred_region
      _
    $region13: #{tpu_custom_call.1} parent=1 // pred_fallthru
      _
    // Predicated region
    $region14: #{tpu_custom_call.1} parent=1 // pred_check
      _
    $region15: #{tpu_custom_call.1} parent=1 // pred_check_branch
      %22 = sbr.rel (0) target = $region17
    $region16: #{tpu_custom_call.1} parent=1 // pred_region
      _
    $region17: #{tpu_custom_call.1} parent=1 // pred_fallthru
      _
    // Predicated region
    $region18: #{tpu_custom_call.1} parent=1 // pred_check
      _
    $region19: #{tpu_custom_call.1} parent=1 // pred_check_branch
      %24 = sbr.rel (0) target = $region21
    $region20: #{tpu_custom_call.1} parent=1 // pred_region
      _
    $region21: #{tpu_custom_call.1} parent=1 // pred_fallthru
      _
    // Predicated region
    $region22: #{tpu_custom_call.1} parent=1 // pred_check
      _
    $region23: #{tpu_custom_call.1} parent=1 // pred_check_branch
      %26 = sbr.rel (0) target = $region25
    $region24: #{tpu_custom_call.1} parent=1 // pred_region
      _
    $region25: #{tpu_custom_call.1} parent=1 // pred_fallthru
      _
    // Predicated region
    $region26: #{tpu_custom_call.1} parent=1 // pred_check
      _
    $region27: #{tpu_custom_call.1} parent=1 // pred_check_branch
      %28 = sbr.rel (0) target = $region29
    $region28: #{tpu_custom_call.1} parent=1 // pred_region
      _
    $region29: #{tpu_custom_call.1} parent=1 // pred_fallthru
      _
    // Predicated region
    $region30: #{tpu_custom_call.1} parent=1 // pred_check
      _
    $region31: #{tpu_custom_call.1} parent=1 // pred_check_branch
      %30 = sbr.rel (0) target = $region33
    $region32: #{tpu_custom_call.1} parent=1 // pred_region
      _
    $region33: #{tpu_custom_call.1} parent=1 // pred_fallthru
      _
    // Predicated region
    $region34: #{tpu_custom_call.1} parent=1 // pred_check
      _
    $region35: #{tpu_custom_call.1} parent=1 // pred_check_branch
      %32 = sbr.rel (0) target = $region37
    $region36: #{tpu_custom_call.1} parent=1 // pred_region
      _
    $region37: #{tpu_custom_call.1} parent=1 // pred_fallthru
      _
    %v34 = vld [vmem:[%s0] sm:$0xff]
    %v35 = vld [vmem:[%s1] sm:$0xff]
    %v36 = vld [vmem:[%s3] sm:$0x1]
    %38 = vset.pattern.permute.xlu0 0
    %39 = vperm.xlu0 %38, %v34
    %v40 = vpop.permute.xlu0 %39
    %v42 = vlaneseq
    %v43 = vshrl.u32 %v42, 7
    %v44 = vsub.s32 0, %v43
    %v45 = vrot.slane %v36, %v44
    %v46 = vmul.f32 %v40, %v45
    %v47 = vld [vmem:[%s3 + $0x1] sm:$0x1]
    %48 = vset.pattern.permute.xlu0 1
    %49 = vperm.xlu0 %48, %v34
    %v50 = vpop.permute.xlu0 %49
    %v52 = vlaneseq
    %v53 = vshrl.u32 %v52, 7
    %v54 = vsub.s32 0, %v53
    %v55 = vrot.slane %v47, %v54
    %v56 = vmul.f32 %v50, %v55
    %v57 = vadd.f32 %v46, %v56
    %v58 = vld [vmem:[%s4] sm:$0x1]
    %v60 = vlaneseq
    %v61 = vshrl.u32 %v60, 7
    %v62 = vsub.s32 0, %v61
    %v63 = vrot.slane %v58, %v62
    %v65 = vadd.f32 %v57, %v63
    %v66 = vmax.f32 %v65, 0.0
    %v67 = vld [vmem:[%s2] sm:$0x1]
    %69 = vset.pattern.permute.xlu0 0
    %70 = vperm.xlu0 %69, %v35
    %v71 = vpop.permute.xlu0 %70
    %v74 = vlaneseq
    %v75 = vshrl.u32 %v74, 7
    %v76 = vsub.s32 0, %v75
    %v77 = vrot.slane %v67, %v76
    %v79 = vmul.f32 %v71, %v77
    %v80 = vadd.f32 %v66, %v79
    %v81 = vpack.c.bf16 %v80, %v80
    %v82 = vld [vmem:[%s5] sm:$0xf]
    %v83 = vld [vmem:[%s5 + $0x4] sm:$0xf]
    %v84 = vld [vmem:[%s5 + $0x8] sm:$0xf]
    %v85 = vld [vmem:[%s5 + $0xc] sm:$0xf]
    %v86 = vld [vmem:[%s5 + $0x10] sm:$0xf]
    %v87 = vld [vmem:[%s5 + $0x14] sm:$0xf]
    %v88 = vld [vmem:[%s5 + $0x18] sm:$0xf]
    %v89 = vld [vmem:[%s5 + $0x1c] sm:$0xf]
    %v90 = vld [vmem:[%s5 + $0x20] sm:$0xf]
    %v91 = vld [vmem:[%s5 + $0x24] sm:$0xf]
    %v92 = vld [vmem:[%s5 + $0x28] sm:$0xf]
    %v93 = vld [vmem:[%s5 + $0x2c] sm:$0xf]
    %v94 = vld [vmem:[%s5 + $0x30] sm:$0xf]
    %v95 = vld [vmem:[%s5 + $0x34] sm:$0xf]
    %v96 = vld [vmem:[%s5 + $0x38] sm:$0xf]
    %v97 = vld [vmem:[%s5 + $0x3c] sm:$0xf]
    %v98 = vld [vmem:[%s6] sm:$0x1]
    %v100 = vlaneseq
    %v101 = vshrl.u32 %v100, 7
    %v102 = vsub.s32 0, %v101
    %v103 = vrot.slane %v98, %v102
    %v121 = vunpack.c.l.b16 %v82
    %v122 = vunpack.c.l.b16 %v83
    %v123 = vunpack.c.l.b16 %v84
    %v124 = vunpack.c.l.b16 %v85
    %v125 = vunpack.c.l.b16 %v86
    %v126 = vunpack.c.l.b16 %v87
    %v127 = vunpack.c.l.b16 %v88
    %v128 = vunpack.c.l.b16 %v89
    %v129 = vunpack.c.l.b16 %v90
    %v130 = vunpack.c.l.b16 %v91
    %v131 = vunpack.c.l.b16 %v92
    %v132 = vunpack.c.l.b16 %v93
    %v133 = vunpack.c.l.b16 %v94
    %v134 = vunpack.c.l.b16 %v95
    %v135 = vunpack.c.l.b16 %v96
    %v136 = vunpack.c.l.b16 %v97
    %v137 = vpack.c.b16 %v122, %v121
    %v138 = vpack.c.b16 %v124, %v123
    %v139 = vpack.c.b16 %v126, %v125
    %v140 = vpack.c.b16 %v128, %v127
    %v141 = vpack.c.b16 %v130, %v129
    %v142 = vpack.c.b16 %v132, %v131
    %v143 = vpack.c.b16 %v134, %v133
    %v144 = vpack.c.b16 %v136, %v135
    %153 = vmatprep.subr.bf16.mxu0 0
    %154 = vmatpush1.bf16.msra.mxu0 %v137
    %155 = vmatprep.subr.bf16.mxu0 0
    %156 = vmatpush1.bf16.msra.mxu0 %v138
    %157 = vmatprep.subr.bf16.mxu0 0
    %158 = vmatpush1.bf16.msra.mxu0 %v139
    %159 = vmatprep.subr.bf16.mxu0 0
    %160 = vmatpush1.bf16.msra.mxu0 %v140
    %161 = vmatprep.subr.bf16.mxu0 0
    %162 = vmatpush1.bf16.msra.mxu0 %v141
    %163 = vmatprep.subr.bf16.mxu0 0
    %164 = vmatpush1.bf16.msra.mxu0 %v142
    %165 = vmatprep.subr.bf16.mxu0 0
    %166 = vmatpush1.bf16.msra.mxu0 %v143
    %167 = vmatprep.subr.bf16.mxu0 0
    %168 = vmatpush1.bf16.msra.mxu0 %v144
    %169 = vmatprep.subr.bf16.mxu0 0
    %170 = vmatpush1.bf16.msra.mxu0 0
    %171 = vmatprep.subr.bf16.mxu0 0
    %172 = vmatpush1.bf16.msra.mxu0 0
    %173 = vmatprep.subr.bf16.mxu0 0
    %174 = vmatpush1.bf16.msra.mxu0 0
    %175 = vmatprep.subr.bf16.mxu0 0
    %176 = vmatpush1.bf16.msra.mxu0 0
    %177 = vmatprep.subr.bf16.mxu0 0
    %178 = vmatpush1.bf16.msra.mxu0 0
    %179 = vmatprep.subr.bf16.mxu0 0
    %180 = vmatpush1.bf16.msra.mxu0 0
    %181 = vmatprep.subr.bf16.mxu0 0
    %182 = vmatpush1.bf16.msra.mxu0 0
    %183 = vmatprep.subr.bf16.mxu0 0
    %184 = vmatpush1.bf16.msra.mxu0 0
    %185 = vmatprep.mubr.bf16.mxu0 0
    %186 = vmatmul.mubr.bf16.gmra.mrb[0].mxu0 %v81
    %v187 = vpop.f32.mrb[0].mxu0
    %v188 = vadd.f32 %v103, %v187
    %v189 = vpop.f32.mrb[0].mxu0
    %v190 = vpop.f32.mrb[0].mxu0
    %v191 = vpop.f32.mrb[0].mxu0
    %192 = vdwg.mxu0
    %v193 = vmax.f32 %v188, 0.0
    %v194 = vpack.c.bf16 %v193, %v193
    %v195 = vld [vmem:[%s7] sm:$0xf]
    %v196 = vld [vmem:[%s7 + $0x4] sm:$0xf]
    %v197 = vld [vmem:[%s7 + $0x8] sm:$0xf]
    %v198 = vld [vmem:[%s7 + $0xc] sm:$0xf]
    %v199 = vld [vmem:[%s7 + $0x10] sm:$0xf]
    %v200 = vld [vmem:[%s7 + $0x14] sm:$0xf]
    %v201 = vld [vmem:[%s7 + $0x18] sm:$0xf]
    %v202 = vld [vmem:[%s7 + $0x1c] sm:$0xf]
    %v203 = vld [vmem:[%s7 + $0x20] sm:$0xf]
    %v204 = vld [vmem:[%s7 + $0x24] sm:$0xf]
    %v205 = vld [vmem:[%s7 + $0x28] sm:$0xf]
    %v206 = vld [vmem:[%s7 + $0x2c] sm:$0xf]
    %v207 = vld [vmem:[%s7 + $0x30] sm:$0xf]
    %v208 = vld [vmem:[%s7 + $0x34] sm:$0xf]
    %v209 = vld [vmem:[%s7 + $0x38] sm:$0xf]
    %v210 = vld [vmem:[%s7 + $0x3c] sm:$0xf]
    %v211 = vld [vmem:[%s8] sm:$0x1]
    %v213 = vlaneseq
    %v214 = vshrl.u32 %v213, 7
    %v215 = vsub.s32 0, %v214
    %v216 = vrot.slane %v211, %v215
    %v234 = vunpack.c.l.b16 %v195
    %v235 = vunpack.c.l.b16 %v196
    %v236 = vunpack.c.l.b16 %v197
    %v237 = vunpack.c.l.b16 %v198
    %v238 = vunpack.c.l.b16 %v199
    %v239 = vunpack.c.l.b16 %v200
    %v240 = vunpack.c.l.b16 %v201
    %v241 = vunpack.c.l.b16 %v202
    %v242 = vunpack.c.l.b16 %v203
    %v243 = vunpack.c.l.b16 %v204
    %v244 = vunpack.c.l.b16 %v205
    %v245 = vunpack.c.l.b16 %v206
    %v246 = vunpack.c.l.b16 %v207
    %v247 = vunpack.c.l.b16 %v208
    %v248 = vunpack.c.l.b16 %v209
    %v249 = vunpack.c.l.b16 %v210
    %v250 = vpack.c.b16 %v235, %v234
    %v251 = vpack.c.b16 %v237, %v236
    %v252 = vpack.c.b16 %v239, %v238
    %v253 = vpack.c.b16 %v241, %v240
    %v254 = vpack.c.b16 %v243, %v242
    %v255 = vpack.c.b16 %v245, %v244
    %v256 = vpack.c.b16 %v247, %v246
    %v257 = vpack.c.b16 %v249, %v248
    %266 = vmatprep.subr.bf16.mxu0 0
    %267 = vmatpush1.bf16.msra.mxu0 %v250
    %268 = vmatprep.subr.bf16.mxu0 0
    %269 = vmatpush1.bf16.msra.mxu0 %v251
    %270 = vmatprep.subr.bf16.mxu0 0
    %271 = vmatpush1.bf16.msra.mxu0 %v252
    %272 = vmatprep.subr.bf16.mxu0 0
    %273 = vmatpush1.bf16.msra.mxu0 %v253
    %274 = vmatprep.subr.bf16.mxu0 0
    %275 = vmatpush1.bf16.msra.mxu0 %v254
    %276 = vmatprep.subr.bf16.mxu0 0
    %277 = vmatpush1.bf16.msra.mxu0 %v255
    %278 = vmatprep.subr.bf16.mxu0 0
    %279 = vmatpush1.bf16.msra.mxu0 %v256
    %280 = vmatprep.subr.bf16.mxu0 0
    %281 = vmatpush1.bf16.msra.mxu0 %v257
    %282 = vmatprep.subr.bf16.mxu0 0
    %283 = vmatpush1.bf16.msra.mxu0 0
    %284 = vmatprep.subr.bf16.mxu0 0
    %285 = vmatpush1.bf16.msra.mxu0 0
    %286 = vmatprep.subr.bf16.mxu0 0
    %287 = vmatpush1.bf16.msra.mxu0 0
    %288 = vmatprep.subr.bf16.mxu0 0
    %289 = vmatpush1.bf16.msra.mxu0 0
    %290 = vmatprep.subr.bf16.mxu0 0
    %291 = vmatpush1.bf16.msra.mxu0 0
    %292 = vmatprep.subr.bf16.mxu0 0
    %293 = vmatpush1.bf16.msra.mxu0 0
    %294 = vmatprep.subr.bf16.mxu0 0
    %295 = vmatpush1.bf16.msra.mxu0 0
    %296 = vmatprep.subr.bf16.mxu0 0
    %297 = vmatpush1.bf16.msra.mxu0 0
    %298 = vmatprep.mubr.bf16.mxu0 0
    %299 = vmatmul.mubr.bf16.gmra.mrb[0].mxu0 %v194
    %v300 = vpop.f32.mrb[0].mxu0
    %v301 = vadd.f32 %v216, %v300
    %v302 = vpop.f32.mrb[0].mxu0
    %v303 = vpop.f32.mrb[0].mxu0
    %v304 = vpop.f32.mrb[0].mxu0
    %305 = vdwg.mxu0
    %vm306 = vcmask 64512
    %307 = vst.msk [vmem:[#allocation2] sm:$0xff] %vm306, %v301
    // Predicated region
    $region38: #{tpu_custom_call.1} parent=1 // pred_check
      _
    $region39: #{tpu_custom_call.1} parent=1 // pred_check_branch
      %309 = sbr.rel (0) target = $region41
    $region40: #{tpu_custom_call.1} parent=1 // pred_region
      %s311 = ssub.s32 128, 128
      %312 = vsyncadd [#allocation3], %s311
      %s314 = sshll.u32 [#allocation2], 4
      %s315 = int_to_ptr.vmem [resolvable:$true] %s314
      %317 = dma.vmem_to_hbm [thread:$0]  %s315, 128, %s9, [#allocation3]
    $region41: #{tpu_custom_call.1} parent=1 // pred_fallthru
      _
    // Predicated region
    $region42: #{tpu_custom_call.1} parent=1 // pred_check
      _
    $region43: #{tpu_custom_call.1} parent=1 // pred_check_branch
      %319 = sbr.rel (0) target = $region45
    $region44: #{tpu_custom_call.1} parent=1 // pred_region
      %320 = dma.done [#allocation3], 128
    $region45: #{tpu_custom_call.1} parent=1 // pred_fallthru
      _
    %321 = vsyncpa [#allocation3], 1

</llo_original>
